<compile_context>
chip_gen: v7x
topology: tpu7x:2x2x1
jax: 0.10.0
libtpu: 0.0.40
codegen_flags: <defaults>
</compile_context>

<pallas_src>
import math

import jax
import jax.numpy as jnp
from jax.experimental import pallas as pl
from jax.experimental.pallas import tpu as pltpu


# ---------------------------------------------------------------------------
# Small helpers
# ---------------------------------------------------------------------------
def _round_up(x: int, m: int) -> int:
    return ((x + m - 1) // m) * m


def _sublane_multiple(itemsize: int) -> int:
    # f32 -> 8, bf16 -> 16, int8/fp8 -> 32
    return max(8, 32 // itemsize)


def _vmem_block_bytes(shape, itemsize: int) -> int:
    """VMEM bytes for a block, accounting for (sublane, lane) layout padding."""
    dims = list(shape)
    if len(dims) >= 1:
        dims[-1] = _round_up(int(dims[-1]), 128)
    if len(dims) >= 2:
        dims[-2] = _round_up(int(dims[-2]), _sublane_multiple(itemsize))
    n = 1
    for d in dims:
        n *= max(int(d), 1)
    return n * itemsize


def _tpu_vmem_capacity_bytes() -> int:
    try:
        return int(pltpu.get_tpu_info().vmem_capacity_bytes)
    except Exception:
        return 64 << 20  # conservative (v7x-sized)


def _device_kind() -> str:
    try:
        return jax.devices()[0].device_kind.lower()
    except Exception:
        return ""


def _generation_params():
    """Returns (tile_budget_bytes, lane_align_pref, n_tensorcores, vmem_cap)."""
    cap = _tpu_vmem_capacity_bytes()
    kind = _device_kind()
    budget = (48 << 20) if cap >= (100 << 20) else (28 << 20)
    # v6e/v7x MXU is 2x256x256 -> prefer 256-aligned N/K tiles; v5e & older: 128.
    lane_pref = 128 if any(t in kind for t in ("v2", "v3", "v4", "v5")) else 256
    # v7x has 2 TensorCores per chip -> keep >= 2 parallel grid steps.
    n_cores = 2 if ("v7" in kind or "7x" in kind) else 1
    return budget, lane_pref, n_cores, cap


def _largest_tile(dim: int, cap: int, align: int) -> int:
    """Largest t <= cap that divides `dim` and is a multiple of `align`."""
    if dim % align != 0:
        align = max(math.gcd(dim, align), 1)
    t = max(align, (min(dim, cap) // align) * align)
    while dim % t != 0:
        t -= align
    return t


def _maybe_buffered_spec(block_shape, index_map, buffers):
    """BlockSpec, optionally with deeper pipelining (guarded for API support)."""
    if buffers is not None and hasattr(pl, "Buffered"):
        try:
            return pl.BlockSpec(block_shape, index_map,
                                pipeline_mode=pl.Buffered(buffers))
        except TypeError:
            pass
    return pl.BlockSpec(block_shape, index_map)


# ---------------------------------------------------------------------------
# Kernel bodies
# ---------------------------------------------------------------------------
def _make_kernel(squeeze_e: bool, single_k: bool):
    """Returns (kernel_fn, needs_acc_scratch)."""
    if squeeze_e:
        def mm(xv, wv):
            return jnp.dot(xv, wv, preferred_element_type=jnp.float32)
    else:
        def mm(xv, wv):
            return jnp.einsum("emk,ekn->emn", xv, wv,
                              preferred_element_type=jnp.float32)

    if single_k:
        # No K loop -> no accumulator, no init/finalize passes: direct write.
        def kernel(x_ref, w_ref, b_ref, o_ref):
            o_ref[...] = (mm(x_ref[...], w_ref[...])
                          + b_ref[...].astype(jnp.float32)).astype(o_ref.dtype)

        return kernel, False

    def kernel(x_ref, w_ref, b_ref, o_ref, acc_ref):
        k = pl.program_id(3)
        partial = mm(x_ref[...], w_ref[...])

        @pl.when(k == 0)
        def _first():
            acc_ref[...] = partial          # assign: no zero-fill + extra add

        @pl.when(k > 0)
        def _accum():
            acc_ref[...] += partial

        @pl.when(k == pl.num_programs(3) - 1)
        def _finalize():
            o_ref[...] = (acc_ref[...]
                          + b_ref[...].astype(jnp.float32)).astype(o_ref.dtype)

    return kernel, True


# ---------------------------------------------------------------------------
# Wrapper
# ---------------------------------------------------------------------------
def ensembled_linear(x: jax.Array, weight: jax.Array, bias: jax.Array,
                     *, compute_dtype=None, _budget_override=None) -> jax.Array:
    """x: (E, B, IN), weight: (E, IN, OUT), bias: (E, 1, OUT) -> (E, B, OUT)."""
    E, B, IN = x.shape
    Ew, INw, OUT = weight.shape
    assert (Ew, INw) == (E, IN), (weight.shape, x.shape)
    assert bias.shape == (E, 1, OUT), bias.shape

    out_dtype = x.dtype
    if compute_dtype is not None:
        # Narrow streaming of the big operands only; bias stays in its own
        # (typically f32) dtype; accumulation is always f32 on the MXU.
        x = x.astype(compute_dtype)
        weight = weight.astype(compute_dtype)

    in_item = jnp.dtype(x.dtype).itemsize
    bias_item = jnp.dtype(bias.dtype).itemsize
    out_item = jnp.dtype(out_dtype).itemsize
    sub = _sublane_multiple(in_item)

    budget, lane_pref, n_cores, vmem_cap = _generation_params()
    if _budget_override is not None:
        budget = int(_budget_override)

    def fp(eb, tm, tn, tk, *, with_acc, w_buffers=2):
        x_b = _vmem_block_bytes((eb, tm, tk), in_item)
        w_b = _vmem_block_bytes((eb, tk, tn), in_item)
        b_b = _vmem_block_bytes((eb, 1, tn), bias_item)
        o_b = _vmem_block_bytes((eb, tm, tn), out_item)
        acc = _vmem_block_bytes((eb, tm, tn), 4) if with_acc else 0
        return 2 * (x_b + b_b + o_b) + w_buffers * w_b + acc

    # ------------------ Fast path: whole member fits in VMEM ------------------
    if fp(1, B, OUT, IN, with_acc=False) <= budget:
        tm, tn, tk = B, OUT, IN
        B_use, IN_use, OUT_use = B, IN, OUT
        single_k = True
        eb_max = E // 2 if (n_cores >= 2 and E >= 2) else E
        eb = 1
        for cand in range(max(eb_max, 1), 0, -1):
            if E % cand == 0 and fp(cand, tm, tn, tk, with_acc=False) <= budget:
                eb = cand
                break
        grid = (E // eb, 1, 1, 1)
    else:
        # ------------------------------ Tiled path ------------------------------
        B_pad = _round_up(B, sub)
        IN_pad = _round_up(IN, 128)
        OUT_pad = _round_up(OUT, 128)

        align_n = lane_pref if OUT_pad % lane_pref == 0 else 128
        align_k = lane_pref if IN_pad % lane_pref == 0 else 128

        tm = _largest_tile(B_pad, 1024, sub)
        tn = _largest_tile(OUT_pad, 2048, align_n)
        tk = _largest_tile(IN_pad, 2048, align_k)

        while fp(1, tm, tn, tk, with_acc=True) > budget:
            if tk > align_k:
                tk = _largest_tile(IN_pad, tk - align_k, align_k)
            elif tn > align_n:
                tn = _largest_tile(OUT_pad, tn - align_n, align_n)
            elif tm > sub:
                tm = _largest_tile(B_pad, tm - sub, sub)
            else:
                break

        # Dims fully covered by one tile need no padding (full-extent block
        # dims are legal) -> no per-call HBM round-trip for those operands.
        if tm == B_pad:
            tm, B_pad = B, B
        if tk == IN_pad:
            tk, IN_pad = IN, IN
        if tn == OUT_pad:
            tn, OUT_pad = OUT, OUT

        single_k = (IN_pad // tk) == 1

        # Ensemble blocking whenever B and IN are fully covered per step
        # (tiny per-member matmul), even if OUT is tiled.
        eb = 1
        if tm == B_pad and single_k and E > 1:
            gJ = OUT_pad // tn
            eb_max = E
            if n_cores >= 2 and E >= 2 and gJ == 1:
                eb_max = E // 2          # keep 2 parallel grid steps on v7x
            for cand in range(max(eb_max, 1), 0, -1):
                if E % cand == 0 and fp(cand, tm, tn, tk, with_acc=False) <= budget:
                    eb = cand
                    break

        # Zero-pad only the dims that are actually tiled.
        # TODO(synk): for very large parameter tensors, pre-pad weight/bias once
        # outside the hot path instead of per call.
        if B_pad != B or IN_pad != IN:
            x = jnp.pad(x, ((0, 0), (0, B_pad - B), (0, IN_pad - IN)))
        if IN_pad != IN or OUT_pad != OUT:
            weight = jnp.pad(weight, ((0, 0), (0, IN_pad - IN), (0, OUT_pad - OUT)))
        if OUT_pad != OUT:
            bias = jnp.pad(bias, ((0, 0), (0, 0), (0, OUT_pad - OUT)))

        B_use, IN_use, OUT_use = B_pad, IN_pad, OUT_pad
        grid = (E // eb, B_pad // tm, OUT_pad // tn, IN_pad // tk)

    # ------------------------- Build specs & kernel -------------------------
    squeeze_e = (eb == 1)
    kernel, needs_acc = _make_kernel(squeeze_e, single_k)
    e_dim = None if squeeze_e else eb   # None -> squeezed leading dim

    grid_steps = 1
    for g in grid:
        grid_steps *= g

    # Deepen the weight pipeline when per-step compute is tiny and many weight
    # tiles stream through (hides exposed DMA latency in the mem-bound regime).
    w_buffers = None
    if (grid_steps >= 3 and tm <= 64
            and fp(eb, tm, tn, tk, with_acc=needs_acc, w_buffers=3) <= budget):
        w_buffers = 3

    x_spec = pl.BlockSpec((e_dim, tm, tk), lambda e, i, j, k: (e, i, k))
    w_spec = _maybe_buffered_spec((e_dim, tk, tn),
                                  lambda e, i, j, k: (e, k, j), w_buffers)
    # bias block is constant across i and k -> stays resident.
    b_spec = pl.BlockSpec((e_dim, 1, tn), lambda e, i, j, k: (e, 0, j))
    o_spec = pl.BlockSpec((e_dim, tm, tn), lambda e, i, j, k: (e, i, j))

    scratch = []
    if needs_acc:
        acc_shape = (tm, tn) if squeeze_e else (eb, tm, tn)
        scratch.append(pltpu.VMEM(acc_shape, jnp.float32))

    fp_bytes = fp(eb, tm, tn, tk, with_acc=needs_acc,
                  w_buffers=(w_buffers or 2))
    vmem_limit = int(min(max(fp_bytes + (4 << 20), 32 << 20),
                         max(vmem_cap - (8 << 20), 32 << 20)))

    out = pl.pallas_call(
        kernel,
        out_shape=jax.ShapeDtypeStruct((E, B_use, OUT_use), out_dtype),
        grid_spec=pltpu.PrefetchScalarGridSpec(
            num_scalar_prefetch=0,
            grid=grid,
            in_specs=[x_spec, w_spec, b_spec],
            out_specs=o_spec,
            scratch_shapes=scratch,
        ),
        compiler_params=pltpu.CompilerParams(
            dimension_semantics=("parallel", "parallel", "parallel", "arbitrary"),
            vmem_limit_bytes=vmem_limit,
        ),
    )(x, weight, bias)

    if B_use != B or OUT_use != OUT:
        out = out[:, :B, :OUT]
    return out


# ---------------------------------------------------------------------------
# Parameter init (mirrors EnsembledLinear.reset_parameters)
# ---------------------------------------------------------------------------
def init_params(key, in_features: int, out_features: int, ensemble_size: int):
    """kaiming_uniform_(a=sqrt(5)) on each (in, out) 2-D slice.

    PyTorch's _calculate_fan_in_and_fan_out on a 2-D (in_features, out_features)
    tensor gives fan_in = size(1) = out_features, so both the weight and the
    bias bound are 1/sqrt(out_features) (a quirk of this module, verified
    against torch.nn.init semantics).
    """
    k_w, k_b = jax.random.split(key)
    fan_in = out_features
    bound = 1.0 / math.sqrt(fan_in) if fan_in > 0 else 0.0
    weight = jax.random.uniform(
        k_w, (ensemble_size, in_features, out_features),
        minval=-bound, maxval=bound, dtype=jnp.float32)
    bias = jax.random.uniform(
        k_b, (ensemble_size, 1, out_features),
        minval=-bound, maxval=bound, dtype=jnp.float32)
    return weight, bias


if __name__ == "__main__":
    key = jax.random.PRNGKey(0)

    # --- Test 1: typical small ensemble shapes (fast path: no padding,
    # --- no accumulator, ensemble-blocked batched einsum). ---
    E, B, IN, OUT = 4, 8, 32, 16
    k_x, k_p = jax.random.split(key)
    x = jax.random.normal(k_x, (E, B, IN), dtype=jnp.float32)
    weight, bias = init_params(k_p, IN, OUT, E)

    out = jax.block_until_ready(ensembled_linear(x, weight, bias))
    ref = jnp.einsum("ebi,eio->ebo", x, weight) + bias
    assert out.shape == (E, B, OUT)
    assert jnp.allclose(out, ref, atol=1e-4, rtol=1e-4)

    # --- Test 2: force the tiled multi-K path (squeezed ensemble dim,
    # --- f32 accumulator, assign-on-k==0) with a tiny artificial budget. ---
    E2, B2, IN2, OUT2 = 2, 16, 384, 256
    k_x2, k_w2, k_b2 = jax.random.split(jax.random.PRNGKey(1), 3)
    x2 = jax.random.normal(k_x2, (E2, B2, IN2), dtype=jnp.float32)
    w2 = jax.random.normal(k_w2, (E2, IN2, OUT2), dtype=jnp.float32) * 0.05
    b2 = jax.random.normal(k_b2, (E2, 1, OUT2), dtype=jnp.float32) * 0.05

    out2 = jax.block_until_ready(
        ensembled_linear(x2, w2, b2, _budget_override=256 * 1024))
    ref2 = jnp.einsum("ebi,eio->ebo", x2, w2) + b2
    assert out2.shape == (E2, B2, OUT2)
    assert jnp.allclose(out2, ref2, atol=1e-3, rtol=1e-3)

    print("KERNEL_OK")
</pallas_src>

<mosaic_0001>
module attributes {stable_mosaic.version = 11 : i64} {
  func.func @kernel(%arg0: i32, %arg1: i32, %arg2: i32, %arg3: i32, %arg4: memref<4x8x32xf32, #tpu.memory_space<vmem>>, %arg5: memref<4x32x16xf32, #tpu.memory_space<vmem>>, %arg6: memref<4x1x16xf32, #tpu.memory_space<vmem>>, %arg7: memref<4x8x16xf32, #tpu.memory_space<vmem>>) attributes {dimension_semantics = [#tpu.dimension_semantics<parallel>, #tpu.dimension_semantics<parallel>, #tpu.dimension_semantics<parallel>, #tpu.dimension_semantics<arbitrary>], iteration_bounds = array<i64: 1, 1, 1, 1>, scalar_prefetch = 0 : i64, scratch_operands = 0 : i64, tpu.core_type = #tpu.core_type<tc>, window_params = [{transform_indices = @transform_0, window_bounds = array<i64: 4, 8, 32>}, {transform_indices = @transform_1, window_bounds = array<i64: 4, 32, 16>}, {transform_indices = @transform_2, window_bounds = array<i64: 4, 1, 16>}, {transform_indices = @transform_3, window_bounds = array<i64: 4, 8, 16>}]} {
    %c0 = arith.constant 0 : index
    %c0_0 = arith.constant 0 : index
    %c0_1 = arith.constant 0 : index
    %0 = vector.load %arg4[%c0, %c0_0, %c0_1] : memref<4x8x32xf32, #tpu.memory_space<vmem>>, vector<4x8x32xf32>
    %c0_2 = arith.constant 0 : index
    %c0_3 = arith.constant 0 : index
    %c0_4 = arith.constant 0 : index
    %1 = vector.load %arg5[%c0_2, %c0_3, %c0_4] : memref<4x32x16xf32, #tpu.memory_space<vmem>>, vector<4x32x16xf32>
    "tpu.trace_start"() <{level = 10 : i32, message = "emk,ekn->emn"}> : () -> ()
    %cst = arith.constant dense<0.000000e+00> : vector<4x8x16xf32>
    %2 = tpu.matmul %0, %1, %cst {dimension_numbers = #tpu.dot_dimension_numbers<[2], [1], [1], [2], [0, 0, 0, 1, 1, 2], [0], [0]>} : vector<4x8x32xf32>, vector<4x32x16xf32>, vector<4x8x16xf32> -> vector<4x8x16xf32>
    "tpu.trace_stop"() : () -> ()
    %c0_5 = arith.constant 0 : index
    %c0_6 = arith.constant 0 : index
    %c0_7 = arith.constant 0 : index
    %3 = vector.load %arg6[%c0_5, %c0_6, %c0_7] : memref<4x1x16xf32, #tpu.memory_space<vmem>>, vector<4x1x16xf32>
    %4 = vector.broadcast %3 : vector<4x1x16xf32> to vector<4x8x16xf32>
    %5 = arith.addf %2, %4 : vector<4x8x16xf32>
    %c0_8 = arith.constant 0 : index
    %c0_9 = arith.constant 0 : index
    %c0_10 = arith.constant 0 : index
    %6 = vector.load %arg7[%c0_8, %c0_9, %c0_10] : memref<4x8x16xf32, #tpu.memory_space<vmem>>, vector<4x8x16xf32>
    tpu.vector_store %arg7[%c0_8, %c0_9, %c0_10], %5 {strides = array<i32>} : memref<4x8x16xf32, #tpu.memory_space<vmem>>, vector<4x8x16xf32>,
    return
  }
  func.func @transform_0(%arg0: i32, %arg1: i32, %arg2: i32, %arg3: i32) -> (i32, i32, i32) {
    %c0_i32 = arith.constant 0 : i32
    return %arg0, %arg1, %arg3 : i32, i32, i32
  }
  func.func @transform_1(%arg0: i32, %arg1: i32, %arg2: i32, %arg3: i32) -> (i32, i32, i32) {
    %c0_i32 = arith.constant 0 : i32
    return %arg0, %arg3, %arg2 : i32, i32, i32
  }
  func.func @transform_2(%arg0: i32, %arg1: i32, %arg2: i32, %arg3: i32) -> (i32, i32, i32) {
    %c0_i32 = arith.constant 0 : i32
    %c0_i32_0 = arith.constant 0 : i32
    return %arg0, %c0_i32, %arg2 : i32, i32, i32
  }
  func.func @transform_3(%arg0: i32, %arg1: i32, %arg2: i32, %arg3: i32) -> (i32, i32, i32) {
    %c0_i32 = arith.constant 0 : i32
    return %arg0, %arg1, %arg2 : i32, i32, i32
  }
}

</mosaic_0001>

<llo_original>
// kernel: tpu_custom_call.1
$region0: #{tpu_custom_call.1}
  #allocation0 [shape = 'u32[]', space=smem, size = 0x4, offset = 0x4, fixed_abs, tag = 'smem constant byte address 0x4 - core index']
  #allocation1 [shape = 'u32[144,128]{1,0:T(1,128)}', space=vmem, size = 0x12000, scoped, tag = 'internal scratch']
  %s0 = inlined_call_operand.vmem [shape: f32[4,8,32], index: 0, kind: input, shape index: {}]
  %s1 = inlined_call_operand.vmem [shape: f32[4,32,16], index: 1, kind: input, shape index: {}]
  %s2 = inlined_call_operand.vmem [shape: f32[4,1,16], index: 2, kind: input, shape index: {}]
  %s3 = inlined_call_operand.hbm [shape: f32[4,8,16], index: 3, kind: output, shape index: {}]
  %s4 = sld [smem:[#allocation0]]
  $region22: #{tpu_custom_call.1} parent=0
    _
  %s6 = ssub.s32 1, %s4
  %s7 = scalar_select 0, %s6, %s4
  $region1: #{tpu_custom_call.1} parent=0
    #allocation2 [shape = 'u8[16384]{0}', space=vmem, size = 0x4000, scoped, tag = 'output window, operand 0, single buffered']
    #allocation3 [shape = 's32[1]{0}', space=sflag, size = 0x4, scoped, tag = 'scoped memory for tpu_custom_call.1']
    %8 = vsyncpa [#allocation3], 0
    // Predicated region
    $region2: #{tpu_custom_call.1} parent=1 // pred_check
      _
    $region3: #{tpu_custom_call.1} parent=1 // pred_check_branch
      %10 = sbr.rel (0) target = $region5
    $region4: #{tpu_custom_call.1} parent=1 // pred_region
      _
    $region5: #{tpu_custom_call.1} parent=1 // pred_fallthru
      _
    // Predicated region
    $region6: #{tpu_custom_call.1} parent=1 // pred_check
      _
    $region7: #{tpu_custom_call.1} parent=1 // pred_check_branch
      %12 = sbr.rel (0) target = $region9
    $region8: #{tpu_custom_call.1} parent=1 // pred_region
      _
    $region9: #{tpu_custom_call.1} parent=1 // pred_fallthru
      _
    // Predicated region
    $region10: #{tpu_custom_call.1} parent=1 // pred_check
      _
    $region11: #{tpu_custom_call.1} parent=1 // pred_check_branch
      %14 = sbr.rel (0) target = $region13
    $region12: #{tpu_custom_call.1} parent=1 // pred_region
      _
    $region13: #{tpu_custom_call.1} parent=1 // pred_fallthru
      _
    %v15 = vld [vmem:[%s0] sm:$0xff]
    %v16 = vld [vmem:[%s0 + $0x8] sm:$0xff]
    %v17 = vld [vmem:[%s0 + $0x10] sm:$0xff]
    %v18 = vld [vmem:[%s0 + $0x18] sm:$0xff]
    %v19 = vld [vmem:[%s1] sm:$0xff]
    %v20 = vld [vmem:[%s1 + $0x8] sm:$0xff]
    %v21 = vld [vmem:[%s1 + $0x10] sm:$0xff]
    %v22 = vld [vmem:[%s1 + $0x18] sm:$0xff]
    %v23 = vld [vmem:[%s1 + $0x20] sm:$0xff]
    %v24 = vld [vmem:[%s1 + $0x28] sm:$0xff]
    %v25 = vld [vmem:[%s1 + $0x30] sm:$0xff]
    %v26 = vld [vmem:[%s1 + $0x38] sm:$0xff]
    %v27 = vld [vmem:[%s1 + $0x40] sm:$0xff]
    %v28 = vld [vmem:[%s1 + $0x48] sm:$0xff]
    %v29 = vld [vmem:[%s1 + $0x50] sm:$0xff]
    %v30 = vld [vmem:[%s1 + $0x58] sm:$0xff]
    %v31 = vld [vmem:[%s1 + $0x60] sm:$0xff]
    %v32 = vld [vmem:[%s1 + $0x68] sm:$0xff]
    %v33 = vld [vmem:[%s1 + $0x70] sm:$0xff]
    %v34 = vld [vmem:[%s1 + $0x78] sm:$0xff]
    %v35 = vld [vmem:[%s2] sm:$0x1]
    %v36 = vld [vmem:[%s2 + $0x1] sm:$0x1]
    %v37 = vld [vmem:[%s2 + $0x2] sm:$0x1]
    %v38 = vld [vmem:[%s2 + $0x3] sm:$0x1]
    %v43 = vlaneseq
    %v44 = vshrl.u32 %v43, 7
    %v45 = vsub.s32 0, %v44
    %v46 = vrot.slane %v35, %v45
    %v47 = vlaneseq
    %v48 = vshrl.u32 %v47, 7
    %v49 = vsub.s32 0, %v48
    %v50 = vrot.slane %v36, %v49
    %v51 = vlaneseq
    %v52 = vshrl.u32 %v51, 7
    %v53 = vsub.s32 0, %v52
    %v54 = vrot.slane %v37, %v53
    %v55 = vlaneseq
    %v56 = vshrl.u32 %v55, 7
    %v57 = vsub.s32 0, %v56
    %v58 = vrot.slane %v38, %v57
    %vm63 = vcmask 261120
    %v65 = vsel %vm63, %v15, 0
    %67 = vmatprep.subr.mxu0 0.0
    %68 = vmatpush1.msra.mxu0 %v19
    %69 = vmatprep.subr.mxu0 0.0
    %70 = vmatpush1.msra.mxu0 %v20
    %71 = vmatprep.subr.mxu0 0.0
    %72 = vmatpush1.msra.mxu0 %v21
    %73 = vmatprep.subr.mxu0 0.0
    %74 = vmatpush1.msra.mxu0 %v22
    %75 = vmatprep.subr.mxu0 0.0
    %76 = vmatpush1.msra.mxu0 0.0
    %77 = vmatprep.subr.mxu0 0.0
    %78 = vmatpush1.msra.mxu0 0.0
    %79 = vmatprep.subr.mxu0 0.0
    %80 = vmatpush1.msra.mxu0 0.0
    %81 = vmatprep.subr.mxu0 0.0
    %82 = vmatpush1.msra.mxu0 0.0
    %83 = vmatprep.subr.mxu0 0.0
    %84 = vmatpush1.msra.mxu0 0.0
    %85 = vmatprep.subr.mxu0 0.0
    %86 = vmatpush1.msra.mxu0 0.0
    %87 = vmatprep.subr.mxu0 0.0
    %88 = vmatpush1.msra.mxu0 0.0
    %89 = vmatprep.subr.mxu0 0.0
    %90 = vmatpush1.msra.mxu0 0.0
    %91 = vmatprep.subr.mxu0 0.0
    %92 = vmatpush1.msra.mxu0 0.0
    %93 = vmatprep.subr.mxu0 0.0
    %94 = vmatpush1.msra.mxu0 0.0
    %95 = vmatprep.subr.mxu0 0.0
    %96 = vmatpush1.msra.mxu0 0.0
    %97 = vmatprep.subr.mxu0 0.0
    %98 = vmatpush1.msra.mxu0 0.0
    %99 = vmatprep.subr.mxu0 0.0
    %100 = vmatpush1.msra.mxu0 0.0
    %101 = vmatprep.subr.mxu0 0.0
    %102 = vmatpush1.msra.mxu0 0.0
    %103 = vmatprep.subr.mxu0 0.0
    %104 = vmatpush1.msra.mxu0 0.0
    %105 = vmatprep.subr.mxu0 0.0
    %106 = vmatpush1.msra.mxu0 0.0
    %107 = vmatprep.subr.mxu0 0.0
    %108 = vmatpush1.msra.mxu0 0.0
    %109 = vmatprep.subr.mxu0 0.0
    %110 = vmatpush1.msra.mxu0 0.0
    %111 = vmatprep.subr.mxu0 0.0
    %112 = vmatpush1.msra.mxu0 0.0
    %113 = vmatprep.subr.mxu0 0.0
    %114 = vmatpush1.msra.mxu0 0.0
    %115 = vmatprep.subr.mxu0 0.0
    %116 = vmatpush1.msra.mxu0 0.0
    %117 = vmatprep.subr.mxu0 0.0
    %118 = vmatpush1.msra.mxu0 0.0
    %119 = vmatprep.subr.mxu0 0.0
    %120 = vmatpush1.msra.mxu0 0.0
    %121 = vmatprep.subr.mxu0 0.0
    %122 = vmatpush1.msra.mxu0 0.0
    %123 = vmatprep.subr.mxu0 0.0
    %124 = vmatpush1.msra.mxu0 0.0
    %125 = vmatprep.subr.mxu0 0.0
    %126 = vmatpush1.msra.mxu0 0.0
    %127 = vmatprep.subr.mxu0 0.0
    %128 = vmatpush1.msra.mxu0 0.0
    %129 = vmatprep.subr.mxu0 0.0
    %130 = vmatpush1.msra.mxu0 0.0
    %131 = vmatprep.mubr.f32.mxu0 0.0
    %132 = vmatmul.mubr.f32.gmra.mrb[0].mxu0 %v65
    %v133 = vpop.f32.mrb[0].mxu0
    %v134 = vadd.f32 %v46, %v133
    %v135 = vpop.f32.mrb[0].mxu0
    %136 = vdwg.mxu0
    %v138 = vsel %vm63, %v16, 0
    %140 = vmatprep.subr.mxu0 0.0
    %141 = vmatpush1.msra.mxu0 %v23
    %142 = vmatprep.subr.mxu0 0.0
    %143 = vmatpush1.msra.mxu0 %v24
    %144 = vmatprep.subr.mxu0 0.0
    %145 = vmatpush1.msra.mxu0 %v25
    %146 = vmatprep.subr.mxu0 0.0
    %147 = vmatpush1.msra.mxu0 %v26
    %148 = vmatprep.subr.mxu0 0.0
    %149 = vmatpush1.msra.mxu0 0.0
    %150 = vmatprep.subr.mxu0 0.0
    %151 = vmatpush1.msra.mxu0 0.0
    %152 = vmatprep.subr.mxu0 0.0
    %153 = vmatpush1.msra.mxu0 0.0
    %154 = vmatprep.subr.mxu0 0.0
    %155 = vmatpush1.msra.mxu0 0.0
    %156 = vmatprep.subr.mxu0 0.0
    %157 = vmatpush1.msra.mxu0 0.0
    %158 = vmatprep.subr.mxu0 0.0
    %159 = vmatpush1.msra.mxu0 0.0
    %160 = vmatprep.subr.mxu0 0.0
    %161 = vmatpush1.msra.mxu0 0.0
    %162 = vmatprep.subr.mxu0 0.0
    %163 = vmatpush1.msra.mxu0 0.0
    %164 = vmatprep.subr.mxu0 0.0
    %165 = vmatpush1.msra.mxu0 0.0
    %166 = vmatprep.subr.mxu0 0.0
    %167 = vmatpush1.msra.mxu0 0.0
    %168 = vmatprep.subr.mxu0 0.0
    %169 = vmatpush1.msra.mxu0 0.0
    %170 = vmatprep.subr.mxu0 0.0
    %171 = vmatpush1.msra.mxu0 0.0
    %172 = vmatprep.subr.mxu0 0.0
    %173 = vmatpush1.msra.mxu0 0.0
    %174 = vmatprep.subr.mxu0 0.0
    %175 = vmatpush1.msra.mxu0 0.0
    %176 = vmatprep.subr.mxu0 0.0
    %177 = vmatpush1.msra.mxu0 0.0
    %178 = vmatprep.subr.mxu0 0.0
    %179 = vmatpush1.msra.mxu0 0.0
    %180 = vmatprep.subr.mxu0 0.0
    %181 = vmatpush1.msra.mxu0 0.0
    %182 = vmatprep.subr.mxu0 0.0
    %183 = vmatpush1.msra.mxu0 0.0
    %184 = vmatprep.subr.mxu0 0.0
    %185 = vmatpush1.msra.mxu0 0.0
    %186 = vmatprep.subr.mxu0 0.0
    %187 = vmatpush1.msra.mxu0 0.0
    %188 = vmatprep.subr.mxu0 0.0
    %189 = vmatpush1.msra.mxu0 0.0
    %190 = vmatprep.subr.mxu0 0.0
    %191 = vmatpush1.msra.mxu0 0.0
    %192 = vmatprep.subr.mxu0 0.0
    %193 = vmatpush1.msra.mxu0 0.0
    %194 = vmatprep.subr.mxu0 0.0
    %195 = vmatpush1.msra.mxu0 0.0
    %196 = vmatprep.subr.mxu0 0.0
    %197 = vmatpush1.msra.mxu0 0.0
    %198 = vmatprep.subr.mxu0 0.0
    %199 = vmatpush1.msra.mxu0 0.0
    %200 = vmatprep.subr.mxu0 0.0
    %201 = vmatpush1.msra.mxu0 0.0
    %202 = vmatprep.subr.mxu0 0.0
    %203 = vmatpush1.msra.mxu0 0.0
    %204 = vmatprep.mubr.f32.mxu0 0.0
    %205 = vmatmul.mubr.f32.gmra.mrb[0].mxu0 %v138
    %v206 = vpop.f32.mrb[0].mxu0
    %v207 = vadd.f32 %v50, %v206
    %v208 = vpop.f32.mrb[0].mxu0
    %209 = vdwg.mxu0
    %v211 = vsel %vm63, %v17, 0
    %213 = vmatprep.subr.mxu0 0.0
    %214 = vmatpush1.msra.mxu0 %v27
    %215 = vmatprep.subr.mxu0 0.0
    %216 = vmatpush1.msra.mxu0 %v28
    %217 = vmatprep.subr.mxu0 0.0
    %218 = vmatpush1.msra.mxu0 %v29
    %219 = vmatprep.subr.mxu0 0.0
    %220 = vmatpush1.msra.mxu0 %v30
    %221 = vmatprep.subr.mxu0 0.0
    %222 = vmatpush1.msra.mxu0 0.0
    %223 = vmatprep.subr.mxu0 0.0
    %224 = vmatpush1.msra.mxu0 0.0
    %225 = vmatprep.subr.mxu0 0.0
    %226 = vmatpush1.msra.mxu0 0.0
    %227 = vmatprep.subr.mxu0 0.0
    %228 = vmatpush1.msra.mxu0 0.0
    %229 = vmatprep.subr.mxu0 0.0
    %230 = vmatpush1.msra.mxu0 0.0
    %231 = vmatprep.subr.mxu0 0.0
    %232 = vmatpush1.msra.mxu0 0.0
    %233 = vmatprep.subr.mxu0 0.0
    %234 = vmatpush1.msra.mxu0 0.0
    %235 = vmatprep.subr.mxu0 0.0
    %236 = vmatpush1.msra.mxu0 0.0
    %237 = vmatprep.subr.mxu0 0.0
    %238 = vmatpush1.msra.mxu0 0.0
    %239 = vmatprep.subr.mxu0 0.0
    %240 = vmatpush1.msra.mxu0 0.0
    %241 = vmatprep.subr.mxu0 0.0
    %242 = vmatpush1.msra.mxu0 0.0
    %243 = vmatprep.subr.mxu0 0.0
    %244 = vmatpush1.msra.mxu0 0.0
    %245 = vmatprep.subr.mxu0 0.0
    %246 = vmatpush1.msra.mxu0 0.0
    %247 = vmatprep.subr.mxu0 0.0
    %248 = vmatpush1.msra.mxu0 0.0
    %249 = vmatprep.subr.mxu0 0.0
    %250 = vmatpush1.msra.mxu0 0.0
    %251 = vmatprep.subr.mxu0 0.0
    %252 = vmatpush1.msra.mxu0 0.0
    %253 = vmatprep.subr.mxu0 0.0
    %254 = vmatpush1.msra.mxu0 0.0
    %255 = vmatprep.subr.mxu0 0.0
    %256 = vmatpush1.msra.mxu0 0.0
    %257 = vmatprep.subr.mxu0 0.0
    %258 = vmatpush1.msra.mxu0 0.0
    %259 = vmatprep.subr.mxu0 0.0
    %260 = vmatpush1.msra.mxu0 0.0
    %261 = vmatprep.subr.mxu0 0.0
    %262 = vmatpush1.msra.mxu0 0.0
    %263 = vmatprep.subr.mxu0 0.0
    %264 = vmatpush1.msra.mxu0 0.0
    %265 = vmatprep.subr.mxu0 0.0
    %266 = vmatpush1.msra.mxu0 0.0
    %267 = vmatprep.subr.mxu0 0.0
    %268 = vmatpush1.msra.mxu0 0.0
    %269 = vmatprep.subr.mxu0 0.0
    %270 = vmatpush1.msra.mxu0 0.0
    %271 = vmatprep.subr.mxu0 0.0
    %272 = vmatpush1.msra.mxu0 0.0
    %273 = vmatprep.subr.mxu0 0.0
    %274 = vmatpush1.msra.mxu0 0.0
    %275 = vmatprep.subr.mxu0 0.0
    %276 = vmatpush1.msra.mxu0 0.0
    %277 = vmatprep.mubr.f32.mxu0 0.0
    %278 = vmatmul.mubr.f32.gmra.mrb[0].mxu0 %v211
    %v279 = vpop.f32.mrb[0].mxu0
    %v280 = vadd.f32 %v54, %v279
    %v281 = vpop.f32.mrb[0].mxu0
    %282 = vdwg.mxu0
    %v284 = vsel %vm63, %v18, 0
    %286 = vmatprep.subr.mxu0 0.0
    %287 = vmatpush1.msra.mxu0 %v31
    %288 = vmatprep.subr.mxu0 0.0
    %289 = vmatpush1.msra.mxu0 %v32
    %290 = vmatprep.subr.mxu0 0.0
    %291 = vmatpush1.msra.mxu0 %v33
    %292 = vmatprep.subr.mxu0 0.0
    %293 = vmatpush1.msra.mxu0 %v34
    %294 = vmatprep.subr.mxu0 0.0
    %295 = vmatpush1.msra.mxu0 0.0
    %296 = vmatprep.subr.mxu0 0.0
    %297 = vmatpush1.msra.mxu0 0.0
    %298 = vmatprep.subr.mxu0 0.0
    %299 = vmatpush1.msra.mxu0 0.0
    %300 = vmatprep.subr.mxu0 0.0
    %301 = vmatpush1.msra.mxu0 0.0
    %302 = vmatprep.subr.mxu0 0.0
    %303 = vmatpush1.msra.mxu0 0.0
    %304 = vmatprep.subr.mxu0 0.0
    %305 = vmatpush1.msra.mxu0 0.0
    %306 = vmatprep.subr.mxu0 0.0
    %307 = vmatpush1.msra.mxu0 0.0
    %308 = vmatprep.subr.mxu0 0.0
    %309 = vmatpush1.msra.mxu0 0.0
    %310 = vmatprep.subr.mxu0 0.0
    %311 = vmatpush1.msra.mxu0 0.0
    %312 = vmatprep.subr.mxu0 0.0
    %313 = vmatpush1.msra.mxu0 0.0
    %314 = vmatprep.subr.mxu0 0.0
    %315 = vmatpush1.msra.mxu0 0.0
    %316 = vmatprep.subr.mxu0 0.0
    %317 = vmatpush1.msra.mxu0 0.0
    %318 = vmatprep.subr.mxu0 0.0
    %319 = vmatpush1.msra.mxu0 0.0
    %320 = vmatprep.subr.mxu0 0.0
    %321 = vmatpush1.msra.mxu0 0.0
    %322 = vmatprep.subr.mxu0 0.0
    %323 = vmatpush1.msra.mxu0 0.0
    %324 = vmatprep.subr.mxu0 0.0
    %325 = vmatpush1.msra.mxu0 0.0
    %326 = vmatprep.subr.mxu0 0.0
    %327 = vmatpush1.msra.mxu0 0.0
    %328 = vmatprep.subr.mxu0 0.0
    %329 = vmatpush1.msra.mxu0 0.0
    %330 = vmatprep.subr.mxu0 0.0
    %331 = vmatpush1.msra.mxu0 0.0
    %332 = vmatprep.subr.mxu0 0.0
    %333 = vmatpush1.msra.mxu0 0.0
    %334 = vmatprep.subr.mxu0 0.0
    %335 = vmatpush1.msra.mxu0 0.0
    %336 = vmatprep.subr.mxu0 0.0
    %337 = vmatpush1.msra.mxu0 0.0
    %338 = vmatprep.subr.mxu0 0.0
    %339 = vmatpush1.msra.mxu0 0.0
    %340 = vmatprep.subr.mxu0 0.0
    %341 = vmatpush1.msra.mxu0 0.0
    %342 = vmatprep.subr.mxu0 0.0
    %343 = vmatpush1.msra.mxu0 0.0
    %344 = vmatprep.subr.mxu0 0.0
    %345 = vmatpush1.msra.mxu0 0.0
    %346 = vmatprep.subr.mxu0 0.0
    %347 = vmatpush1.msra.mxu0 0.0
    %348 = vmatprep.subr.mxu0 0.0
    %349 = vmatpush1.msra.mxu0 0.0
    %350 = vmatprep.mubr.f32.mxu0 0.0
    %351 = vmatmul.mubr.f32.gmra.mrb[0].mxu0 %v284
    %v352 = vpop.f32.mrb[0].mxu0
    %v353 = vadd.f32 %v58, %v352
    %v354 = vpop.f32.mrb[0].mxu0
    %355 = vdwg.mxu0
    %vm356 = vcmask 130048
    %357 = vst.msk [vmem:[#allocation2] sm:$0xff] %vm356, %v134
    %358 = vst.msk [vmem:[#allocation2 + $0x8] sm:$0xff] %vm356, %v207
    %359 = vst.msk [vmem:[#allocation2 + $0x10] sm:$0xff] %vm356, %v280
    %360 = vst.msk [vmem:[#allocation2 + $0x18] sm:$0xff] %vm356, %v353
    // Predicated region
    $region14: #{tpu_custom_call.1} parent=1 // pred_check
      _
    $region15: #{tpu_custom_call.1} parent=1 // pred_check_branch
      %362 = sbr.rel (0) target = $region17
    $region16: #{tpu_custom_call.1} parent=1 // pred_region
      %s364 = ssub.s32 512, 512
      %365 = vsyncadd [#allocation3], %s364
      %s366 = sshll.u32 [#allocation2], 4
      %s367 = int_to_ptr.vmem [resolvable:$true] %s366
      %372 = dma.vmem_to_hbm [thread:$0]  %s367, 512, %s3, [#allocation3], 128, 128, 8
    $region17: #{tpu_custom_call.1} parent=1 // pred_fallthru
      _
    // Predicated region
    $region18: #{tpu_custom_call.1} parent=1 // pred_check
      _
    $region19: #{tpu_custom_call.1} parent=1 // pred_check_branch
      %374 = sbr.rel (0) target = $region21
    $region20: #{tpu_custom_call.1} parent=1 // pred_region
      %375 = dma.done [#allocation3], 512
    $region21: #{tpu_custom_call.1} parent=1 // pred_fallthru
      _
    %376 = vsyncpa [#allocation3], 1

</llo_original>
